<compile_context>
chip_gen: v6e
topology: v6e:2x2x1
jax: 0.10.0
libtpu: 0.0.40
codegen_flags: <defaults>
</compile_context>

<pallas_src>
import functools

import jax
import jax.numpy as jnp
from jax.experimental import pallas as pl
from jax.experimental.pallas import tpu as pltpu

LANE = 128


def _round_up(n, m):
    return ((n + m - 1) // m) * m


def _critic_kernel(x_ref, a_ref, w1_ref, b1_ref, w2_ref, b2_ref,
                   w3_ref, b3_ref, out_ref, *, compute_dtype):
    # ---- Layer 1: Linear(obs, 400) + ReLU, lane-padded to k2p (=512) --------
    x = x_ref[...].astype(compute_dtype)                       # (TB, obs)
    h1 = jnp.dot(x, w1_ref[...], preferred_element_type=jnp.float32)
    h1 = jnp.maximum(h1 + b1_ref[...], 0.0)                    # (TB, k2p) f32
    # Columns [400:k2p] of h1 are exact zeros (w1/b1 were zero-padded).

    # ---- Fused concat: action lives in the spare lanes of the padded frame --
    # a_ref holds `a` embedded at columns [400:400+act], zeros elsewhere, so a
    # single elementwise add reproduces torch.cat([relu(obs_net(x)), a], 1).
    cat = h1.astype(compute_dtype) + a_ref[...].astype(compute_dtype)

    # ---- Layer 2: Linear(400+act, 300) + ReLU, one MXU pass (K = k2p) -------
    h2 = jnp.dot(cat, w2_ref[...], preferred_element_type=jnp.float32)
    h2 = jnp.maximum(h2 + b2_ref[...], 0.0)                    # (TB, 300) f32

    # ---- Layer 3: Linear(300, 1) as VPU mul + lane reduction (no N=1 MXU) ---
    out_ref[...] = (jnp.sum(h2 * w3_ref[...], axis=-1, keepdims=True)
                    + b3_ref[...])                             # (TB, 1) f32


def ddpg_critic_forward(x, a, params, *, tb=512, use_bf16=True):
    """x: (B, obs_size) f32, a: (B, act_size) f32 -> (B, 1) f32."""
    w1, b1, w2, b2, w3, b3 = (params[k] for k in
                              ("w1", "b1", "w2", "b2", "w3", "b3"))
    B, obs = x.shape
    act = a.shape[1]
    h1_w = w1.shape[0]          # 400, derived from the weights (not hard-coded)
    h2_w = w2.shape[0]          # 300
    assert w2.shape[1] == h1_w + act, "w2 must act on concat([obs_feat, a])"

    k2p = _round_up(h1_w + act, LANE)          # 400+act -> 512 for small act
    compute_dtype = jnp.bfloat16 if use_bf16 else jnp.float32

    # --- one-time weight/bias preparation (wrapper-side, folded by XLA) ------
    w1t = (jnp.zeros((obs, k2p), compute_dtype)
           .at[:, :h1_w].set(w1.T.astype(compute_dtype)))          # (obs, k2p)
    b1p = (jnp.zeros((1, k2p), jnp.float32)
           .at[:, :h1_w].set(b1.astype(jnp.float32)))              # (1, k2p)
    w2t = (jnp.zeros((k2p, h2_w), compute_dtype)
           .at[:h1_w + act, :].set(w2.T.astype(compute_dtype)))     # (k2p, 300)
    b2r = b2.reshape(1, h2_w).astype(jnp.float32)                   # (1, 300)
    w3r = w3.reshape(1, h2_w).astype(jnp.float32)                   # (1, 300)
    b3r = b3.reshape(1, 1).astype(jnp.float32)                      # (1, 1)

    # Embed the action into the padded hidden frame once, outside the kernel,
    # so the kernel's second layer needs no unaligned lane writes.
    a_wide = (jnp.zeros((B, k2p), compute_dtype)
              .at[:, h1_w:h1_w + act].set(a.astype(compute_dtype)))
    x_in = x.astype(compute_dtype)

    # --- batch tiling ---------------------------------------------------------
    TB = B if B <= tb else tb                  # tb must be a multiple of 8
    grid = (pl.cdiv(B, TB),)

    row = lambda w: pl.BlockSpec((TB, w), lambda i: (i, 0))     # batch-tiled
    const = lambda s: pl.BlockSpec(s, lambda i: (0, 0))         # VMEM-resident

    kernel = functools.partial(_critic_kernel, compute_dtype=compute_dtype)
    return pl.pallas_call(
        kernel,
        out_shape=jax.ShapeDtypeStruct((B, 1), jnp.float32),
        grid=grid,
        in_specs=[
            row(obs),                 # x
            row(k2p),                 # a (embedded into the padded frame)
            const((obs, k2p)),        # w1^T (padded)
            const((1, k2p)),          # b1 (padded)
            const((k2p, h2_w)),       # w2^T (padded)
            const((1, h2_w)),         # b2
            const((1, h2_w)),         # w3 as a row
            const((1, 1)),            # b3
        ],
        out_specs=row(1),
        compiler_params=pltpu.CompilerParams(
            dimension_semantics=("parallel",)),
    )(x_in, a_wide, w1t, b1p, w2t, b2r, w3r, b3r)


def init_params(key, obs_size, act_size):
    """Deterministic init mirroring nn.Linear's U(-1/sqrt(fan_in), +1/sqrt(fan_in))."""
    def linear(k, out_f, in_f):
        kw, kb = jax.random.split(k)
        bound = 1.0 / jnp.sqrt(jnp.float32(in_f))
        w = jax.random.uniform(kw, (out_f, in_f), jnp.float32, -bound, bound)
        b = jax.random.uniform(kb, (out_f,), jnp.float32, -bound, bound)
        return w, b

    k1, k2, k3 = jax.random.split(key, 3)
    w1, b1 = linear(k1, 400, obs_size)
    w2, b2 = linear(k2, 300, 400 + act_size)
    w3, b3 = linear(k3, 1, 300)
    return dict(w1=w1, b1=b1, w2=w2, b2=b2, w3=w3, b3=b3)


def reference_forward(x, a, p):
    """Pure-JAX reference of the PyTorch forward."""
    h1 = jnp.maximum(x @ p["w1"].T + p["b1"], 0.0)
    cat = jnp.concatenate([h1, a], axis=1)
    h2 = jnp.maximum(cat @ p["w2"].T + p["b2"], 0.0)
    return h2 @ p["w3"].T + p["b3"]


if __name__ == "__main__":
    B, OBS, ACT = 8, 32, 8
    key = jax.random.PRNGKey(0)
    kx, ka, kp = jax.random.split(key, 3)

    x = jax.random.normal(kx, (B, OBS), jnp.float32)
    a = jax.random.normal(ka, (B, ACT), jnp.float32)
    params = init_params(kp, OBS, ACT)

    ref = reference_forward(x, a, params)

    # Exact-precision path (f32 MXU inputs).
    out_f32 = jax.block_until_ready(
        ddpg_critic_forward(x, a, params, use_bf16=False))
    assert out_f32.shape == (B, 1)
    assert jnp.allclose(out_f32, ref, atol=1e-4, rtol=1e-4), "f32 mismatch"

    # Fast path (bf16 MXU inputs, f32 accumulation).
    out_bf16 = jax.block_until_ready(
        ddpg_critic_forward(x, a, params, use_bf16=True))
    assert out_bf16.shape == (B, 1)
    assert jnp.allclose(out_bf16, ref, atol=5e-2, rtol=5e-2), "bf16 mismatch"

    print("KERNEL_OK")
</pallas_src>

<mosaic_0001>
module attributes {stable_mosaic.version = 11 : i64} {
  func.func @_critic_kernel(%arg0: i32, %arg1: memref<8x32xf32, #tpu.memory_space<vmem>>, %arg2: memref<8x512xf32, #tpu.memory_space<vmem>>, %arg3: memref<32x512xf32, #tpu.memory_space<vmem>>, %arg4: memref<1x512xf32, #tpu.memory_space<vmem>>, %arg5: memref<512x300xf32, #tpu.memory_space<vmem>>, %arg6: memref<1x300xf32, #tpu.memory_space<vmem>>, %arg7: memref<1x300xf32, #tpu.memory_space<vmem>>, %arg8: memref<1x1xf32, #tpu.memory_space<vmem>>, %arg9: memref<8x1xf32, #tpu.memory_space<vmem>>) attributes {dimension_semantics = [#tpu.dimension_semantics<parallel>], iteration_bounds = array<i64: 1>, scalar_prefetch = 0 : i64, scratch_operands = 0 : i64, tpu.core_type = #tpu.core_type<tc>, window_params = [{transform_indices = @transform_0, window_bounds = array<i64: 8, 32>}, {transform_indices = @transform_1, window_bounds = array<i64: 8, 512>}, {pipeline_mode = #tpu.pipeline_mode<synchronous>, transform_indices = @transform_2, window_bounds = array<i64: 32, 512>}, {pipeline_mode = #tpu.pipeline_mode<synchronous>, transform_indices = @transform_3, window_bounds = array<i64: 1, 512>}, {pipeline_mode = #tpu.pipeline_mode<synchronous>, transform_indices = @transform_4, window_bounds = array<i64: 512, 300>}, {pipeline_mode = #tpu.pipeline_mode<synchronous>, transform_indices = @transform_5, window_bounds = array<i64: 1, 300>}, {pipeline_mode = #tpu.pipeline_mode<synchronous>, transform_indices = @transform_6, window_bounds = array<i64: 1, 300>}, {pipeline_mode = #tpu.pipeline_mode<synchronous>, transform_indices = @transform_7, window_bounds = array<i64: 1, 1>}, {transform_indices = @transform_8, window_bounds = array<i64: 8, 1>}]} {
    %c0 = arith.constant 0 : index
    %c0_0 = arith.constant 0 : index
    %0 = vector.load %arg1[%c0, %c0_0] : memref<8x32xf32, #tpu.memory_space<vmem>>, vector<8x32xf32>
    %c0_1 = arith.constant 0 : index
    %c0_2 = arith.constant 0 : index
    %1 = vector.load %arg3[%c0_1, %c0_2] : memref<32x512xf32, #tpu.memory_space<vmem>>, vector<32x512xf32>
    %cst = arith.constant dense<0.000000e+00> : vector<8x512xf32>
    %2 = tpu.matmul %0, %1, %cst {dimension_numbers = #tpu.dot_dimension_numbers<[1], [0], [0], [1], [0, 0, 1, 1], [], []>} : vector<8x32xf32>, vector<32x512xf32>, vector<8x512xf32> -> vector<8x512xf32>
    %c0_3 = arith.constant 0 : index
    %c0_4 = arith.constant 0 : index
    %3 = vector.load %arg4[%c0_3, %c0_4] : memref<1x512xf32, #tpu.memory_space<vmem>>, vector<1x512xf32>
    %4 = vector.broadcast %3 : vector<1x512xf32> to vector<8x512xf32>
    %5 = arith.addf %2, %4 : vector<8x512xf32>
    %cst_5 = arith.constant 0.000000e+00 : f32
    %6 = vector.broadcast %cst_5 : f32 to vector<8x512xf32>
    %7 = arith.maximumf %5, %6 : vector<8x512xf32>
    %c0_6 = arith.constant 0 : index
    %c0_7 = arith.constant 0 : index
    %8 = vector.load %arg2[%c0_6, %c0_7] : memref<8x512xf32, #tpu.memory_space<vmem>>, vector<8x512xf32>
    %9 = arith.addf %7, %8 : vector<8x512xf32>
    %c0_8 = arith.constant 0 : index
    %c0_9 = arith.constant 0 : index
    %10 = vector.load %arg5[%c0_8, %c0_9] : memref<512x300xf32, #tpu.memory_space<vmem>>, vector<512x300xf32>
    %cst_10 = arith.constant dense<0.000000e+00> : vector<8x300xf32>
    %11 = tpu.matmul %9, %10, %cst_10 {dimension_numbers = #tpu.dot_dimension_numbers<[1], [0], [0], [1], [0, 0, 1, 1], [], []>} : vector<8x512xf32>, vector<512x300xf32>, vector<8x300xf32> -> vector<8x300xf32>
    %c0_11 = arith.constant 0 : index
    %c0_12 = arith.constant 0 : index
    %12 = vector.load %arg6[%c0_11, %c0_12] : memref<1x300xf32, #tpu.memory_space<vmem>>, vector<1x300xf32>
    %13 = vector.broadcast %12 : vector<1x300xf32> to vector<8x300xf32>
    %14 = arith.addf %11, %13 : vector<8x300xf32>
    %cst_13 = arith.constant 0.000000e+00 : f32
    %15 = vector.broadcast %cst_13 : f32 to vector<8x300xf32>
    %16 = arith.maximumf %14, %15 : vector<8x300xf32>
    %c0_14 = arith.constant 0 : index
    %c0_15 = arith.constant 0 : index
    %17 = vector.load %arg7[%c0_14, %c0_15] : memref<1x300xf32, #tpu.memory_space<vmem>>, vector<1x300xf32>
    %18 = vector.broadcast %17 : vector<1x300xf32> to vector<8x300xf32>
    %19 = arith.mulf %16, %18 : vector<8x300xf32>
    %cst_16 = arith.constant dense<0.000000e+00> : vector<8xf32>
    %20 = vector.multi_reduction <add>, %19, %cst_16 [1] : vector<8x300xf32> to vector<8xf32>
    %21 = vector.shape_cast %20 : vector<8xf32> to vector<8x1xf32>
    %c0_17 = arith.constant 0 : index
    %c0_18 = arith.constant 0 : index
    %22 = vector.load %arg8[%c0_17, %c0_18] : memref<1x1xf32, #tpu.memory_space<vmem>>, vector<1x1xf32>
    %23 = vector.broadcast %22 : vector<1x1xf32> to vector<8x1xf32>
    %24 = arith.addf %21, %23 : vector<8x1xf32>
    %c0_19 = arith.constant 0 : index
    %c0_20 = arith.constant 0 : index
    %25 = vector.load %arg9[%c0_19, %c0_20] : memref<8x1xf32, #tpu.memory_space<vmem>>, vector<8x1xf32>
    tpu.vector_store %arg9[%c0_19, %c0_20], %24 {strides = array<i32>} : memref<8x1xf32, #tpu.memory_space<vmem>>, vector<8x1xf32>,
    return
  }
  func.func @transform_0(%arg0: i32) -> (i32, i32) {
    %c0_i32 = arith.constant 0 : i32
    %c0_i32_0 = arith.constant 0 : i32
    return %arg0, %c0_i32 : i32, i32
  }
  func.func @transform_1(%arg0: i32) -> (i32, i32) {
    %c0_i32 = arith.constant 0 : i32
    %c0_i32_0 = arith.constant 0 : i32
    return %arg0, %c0_i32 : i32, i32
  }
  func.func @transform_2(%arg0: i32) -> (i32, i32) {
    %c0_i32 = arith.constant 0 : i32
    %c0_i32_0 = arith.constant 0 : i32
    %c0_i32_1 = arith.constant 0 : i32
    return %c0_i32, %c0_i32_0 : i32, i32
  }
  func.func @transform_3(%arg0: i32) -> (i32, i32) {
    %c0_i32 = arith.constant 0 : i32
    %c0_i32_0 = arith.constant 0 : i32
    %c0_i32_1 = arith.constant 0 : i32
    return %c0_i32, %c0_i32_0 : i32, i32
  }
  func.func @transform_4(%arg0: i32) -> (i32, i32) {
    %c0_i32 = arith.constant 0 : i32
    %c0_i32_0 = arith.constant 0 : i32
    %c0_i32_1 = arith.constant 0 : i32
    return %c0_i32, %c0_i32_0 : i32, i32
  }
  func.func @transform_5(%arg0: i32) -> (i32, i32) {
    %c0_i32 = arith.constant 0 : i32
    %c0_i32_0 = arith.constant 0 : i32
    %c0_i32_1 = arith.constant 0 : i32
    return %c0_i32, %c0_i32_0 : i32, i32
  }
  func.func @transform_6(%arg0: i32) -> (i32, i32) {
    %c0_i32 = arith.constant 0 : i32
    %c0_i32_0 = arith.constant 0 : i32
    %c0_i32_1 = arith.constant 0 : i32
    return %c0_i32, %c0_i32_0 : i32, i32
  }
  func.func @transform_7(%arg0: i32) -> (i32, i32) {
    %c0_i32 = arith.constant 0 : i32
    %c0_i32_0 = arith.constant 0 : i32
    %c0_i32_1 = arith.constant 0 : i32
    return %c0_i32, %c0_i32_0 : i32, i32
  }
  func.func @transform_8(%arg0: i32) -> (i32, i32) {
    %c0_i32 = arith.constant 0 : i32
    %c0_i32_0 = arith.constant 0 : i32
    return %arg0, %c0_i32 : i32, i32
  }
}

</mosaic_0001>

<llo_original>
// kernel: tpu_custom_call.1
$region0: #{tpu_custom_call.1}
  #allocation0 [shape = 'u32[]', space=smem, size = 0x4, offset = 0x4, fixed_abs, tag = 'smem constant byte address 0x4 - core index']
  #allocation1 [shape = 'u32[144,128]{1,0:T(1,128)}', space=vmem, size = 0x12000, scoped, tag = 'internal scratch']
  #allocation2 [shape = 'f32[1,1]{1,0:T(1,128)S(1)}', space=vmem, size = 0x200, scoped, tag = 'scoped memory for tpu_custom_call.1']
  %s0 = inlined_call_operand.vmem [shape: f32[8,32], index: 0, kind: input, shape index: {}]
  %s1 = inlined_call_operand.vmem [shape: f32[8,512], index: 1, kind: input, shape index: {}]
  %s2 = inlined_call_operand.vmem [shape: f32[32,512], index: 2, kind: input, shape index: {}]
  %s3 = inlined_call_operand.vmem [shape: f32[1,512], index: 3, kind: input, shape index: {}]
  %s4 = inlined_call_operand.vmem [shape: f32[512,300], index: 4, kind: input, shape index: {}]
  %s5 = inlined_call_operand.vmem [shape: f32[1,300], index: 5, kind: input, shape index: {}]
  %s6 = inlined_call_operand.vmem [shape: f32[1,300], index: 6, kind: input, shape index: {}]
  %s7 = inlined_call_operand.<no memory space> [shape: f32[1,1], index: 7, kind: input, shape index: {}]
  %s8 = inlined_call_operand.vmem [shape: f32[8,1], index: 8, kind: output, shape index: {}]
  %s9 = sld [smem:[#allocation0]]
  $region42: #{tpu_custom_call.1} parent=0
    _
  %s11 = ssub.s32 1, %s9
  %s12 = scalar_select 0, %s11, %s9
  %v13 = vstv %s7
  %14 = vst [vmem:[#allocation2] sm:$0x1] %v13
  // Predicated region
  $region2: #{tpu_custom_call.1} parent=0 // pred_check
    _
  $region3: #{tpu_custom_call.1} parent=0 // pred_check_branch
    %16 = sbr.rel (0) target = $region5
  $region4: #{tpu_custom_call.1} parent=0 // pred_region
    _
  $region5: #{tpu_custom_call.1} parent=0 // pred_fallthru
    _
  // Predicated region
  $region6: #{tpu_custom_call.1} parent=0 // pred_check
    _
  $region7: #{tpu_custom_call.1} parent=0 // pred_check_branch
    %18 = sbr.rel (0) target = $region9
  $region8: #{tpu_custom_call.1} parent=0 // pred_region
    _
  $region9: #{tpu_custom_call.1} parent=0 // pred_fallthru
    _
  // Predicated region
  $region10: #{tpu_custom_call.1} parent=0 // pred_check
    _
  $region11: #{tpu_custom_call.1} parent=0 // pred_check_branch
    %20 = sbr.rel (0) target = $region13
  $region12: #{tpu_custom_call.1} parent=0 // pred_region
    _
  $region13: #{tpu_custom_call.1} parent=0 // pred_fallthru
    _
  // Predicated region
  $region14: #{tpu_custom_call.1} parent=0 // pred_check
    _
  $region15: #{tpu_custom_call.1} parent=0 // pred_check_branch
    %22 = sbr.rel (0) target = $region17
  $region16: #{tpu_custom_call.1} parent=0 // pred_region
    _
  $region17: #{tpu_custom_call.1} parent=0 // pred_fallthru
    _
  // Predicated region
  $region18: #{tpu_custom_call.1} parent=0 // pred_check
    _
  $region19: #{tpu_custom_call.1} parent=0 // pred_check_branch
    %24 = sbr.rel (0) target = $region21
  $region20: #{tpu_custom_call.1} parent=0 // pred_region
    _
  $region21: #{tpu_custom_call.1} parent=0 // pred_fallthru
    _
  // Predicated region
  $region22: #{tpu_custom_call.1} parent=0 // pred_check
    _
  $region23: #{tpu_custom_call.1} parent=0 // pred_check_branch
    %26 = sbr.rel (0) target = $region25
  $region24: #{tpu_custom_call.1} parent=0 // pred_region
    _
  $region25: #{tpu_custom_call.1} parent=0 // pred_fallthru
    _
  // Predicated region
  $region26: #{tpu_custom_call.1} parent=0 // pred_check
    _
  $region27: #{tpu_custom_call.1} parent=0 // pred_check_branch
    %28 = sbr.rel (0) target = $region29
  $region28: #{tpu_custom_call.1} parent=0 // pred_region
    _
  $region29: #{tpu_custom_call.1} parent=0 // pred_fallthru
    _
  // Predicated region
  $region30: #{tpu_custom_call.1} parent=0 // pred_check
    _
  $region31: #{tpu_custom_call.1} parent=0 // pred_check_branch
    %30 = sbr.rel (0) target = $region33
  $region32: #{tpu_custom_call.1} parent=0 // pred_region
    _
  $region33: #{tpu_custom_call.1} parent=0 // pred_fallthru
    _
  %v31 = vld [vmem:[%s0] sm:$0xff]
  %v32 = vld [vmem:[%s2] sm:$0xff]
  %v33 = vld [vmem:[%s2 + $0x8] sm:$0xff]
  %v34 = vld [vmem:[%s2 + $0x10] sm:$0xff]
  %v35 = vld [vmem:[%s2 + $0x18] sm:$0xff]
  %v36 = vld [vmem:[%s2 + $0x20] sm:$0xff]
  %v37 = vld [vmem:[%s2 + $0x28] sm:$0xff]
  %v38 = vld [vmem:[%s2 + $0x30] sm:$0xff]
  %v39 = vld [vmem:[%s2 + $0x38] sm:$0xff]
  %v40 = vld [vmem:[%s2 + $0x40] sm:$0xff]
  %v41 = vld [vmem:[%s2 + $0x48] sm:$0xff]
  %v42 = vld [vmem:[%s2 + $0x50] sm:$0xff]
  %v43 = vld [vmem:[%s2 + $0x58] sm:$0xff]
  %v44 = vld [vmem:[%s2 + $0x60] sm:$0xff]
  %v45 = vld [vmem:[%s2 + $0x68] sm:$0xff]
  %v46 = vld [vmem:[%s2 + $0x70] sm:$0xff]
  %v47 = vld [vmem:[%s2 + $0x78] sm:$0xff]
  %v48 = vld [vmem:[%s3] sm:$0xf]
  %v50 = vlaneseq
  %v51 = vshrl.u32 %v50, 7
  %v52 = vsub.s32 0, %v51
  %v53 = vrot.slane %v48, %v52
  %v54 = vlaneseq
  %v55 = vshrl.u32 %v54, 7
  %v56 = vsub.s32 1, %v55
  %v57 = vrot.slane %v48, %v56
  %v58 = vlaneseq
  %v59 = vshrl.u32 %v58, 7
  %v60 = vsub.s32 2, %v59
  %v61 = vrot.slane %v48, %v60
  %v62 = vlaneseq
  %v63 = vshrl.u32 %v62, 7
  %v64 = vsub.s32 3, %v63
  %v65 = vrot.slane %v48, %v64
  %vm70 = vcmask 261120
  %v72 = vsel %vm70, %v31, 0
  %74 = vmatprep.subr.mxu0 0.0
  %75 = vmatpush1.msra.mxu0 0.0
  %76 = vmatprep.subr.mxu0 0.0
  %77 = vmatpush1.msra.mxu0 0.0
  %78 = vmatprep.subr.mxu0 0.0
  %79 = vmatpush1.msra.mxu0 0.0
  %80 = vmatprep.subr.mxu0 0.0
  %81 = vmatpush1.msra.mxu0 0.0
  %82 = vmatprep.subr.mxu0 0.0
  %83 = vmatpush1.msra.mxu0 0.0
  %84 = vmatprep.subr.mxu0 0.0
  %85 = vmatpush1.msra.mxu0 0.0
  %86 = vmatprep.subr.mxu0 0.0
  %87 = vmatpush1.msra.mxu0 0.0
  %88 = vmatprep.subr.mxu0 0.0
  %89 = vmatpush1.msra.mxu0 0.0
  %90 = vmatprep.subr.mxu0 0.0
  %91 = vmatpush1.msra.mxu0 0.0
  %92 = vmatprep.subr.mxu0 0.0
  %93 = vmatpush1.msra.mxu0 0.0
  %94 = vmatprep.subr.mxu0 0.0
  %95 = vmatpush1.msra.mxu0 0.0
  %96 = vmatprep.subr.mxu0 0.0
  %97 = vmatpush1.msra.mxu0 0.0
  %98 = vmatprep.subr.mxu0 %v45
  %99 = vmatpush1.msra.mxu0 %v44
  %100 = vmatprep.subr.mxu0 %v41
  %101 = vmatpush1.msra.mxu0 %v40
  %102 = vmatprep.subr.mxu0 %v37
  %103 = vmatpush1.msra.mxu0 %v36
  %104 = vmatprep.subr.mxu0 %v33
  %105 = vmatpush1.msra.mxu0 %v32
  %106 = vmatprep.subr.mxu0 0.0
  %107 = vmatpush2.msra.mxu0 0.0
  %108 = vmatprep.subr.mxu0 0.0
  %109 = vmatpush2.msra.mxu0 0.0
  %110 = vmatprep.subr.mxu0 0.0
  %111 = vmatpush2.msra.mxu0 0.0
  %112 = vmatprep.subr.mxu0 0.0
  %113 = vmatpush2.msra.mxu0 0.0
  %114 = vmatprep.subr.mxu0 0.0
  %115 = vmatpush2.msra.mxu0 0.0
  %116 = vmatprep.subr.mxu0 0.0
  %117 = vmatpush2.msra.mxu0 0.0
  %118 = vmatprep.subr.mxu0 0.0
  %119 = vmatpush2.msra.mxu0 0.0
  %120 = vmatprep.subr.mxu0 0.0
  %121 = vmatpush2.msra.mxu0 0.0
  %122 = vmatprep.subr.mxu0 0.0
  %123 = vmatpush2.msra.mxu0 0.0
  %124 = vmatprep.subr.mxu0 0.0
  %125 = vmatpush2.msra.mxu0 0.0
  %126 = vmatprep.subr.mxu0 0.0
  %127 = vmatpush2.msra.mxu0 0.0
  %128 = vmatprep.subr.mxu0 0.0
  %129 = vmatpush2.msra.mxu0 0.0
  %130 = vmatprep.subr.mxu0 0.0
  %131 = vmatpush2.msra.mxu0 0.0
  %132 = vmatprep.subr.mxu0 0.0
  %133 = vmatpush2.msra.mxu0 0.0
  %134 = vmatprep.subr.mxu0 0.0
  %135 = vmatpush2.msra.mxu0 0.0
  %136 = vmatprep.subr.mxu0 0.0
  %137 = vmatpush2.msra.mxu0 0.0
  %138 = vmatprep.mubr.f32.mxu0 0.0
  %139 = vmatmul.mubr.f32.gmra.mxu0 %v72
  %v140 = vpop.f32.mrf.mxu0
  %v141 = vadd.f32 %v53, %v140
  %v142 = vpop.f32.mrf.mxu0
  %v143 = vadd.f32 %v57, %v142
  %144 = vdwg.mxu0
  %145 = vmatprep.subr.mxu0 0.0
  %146 = vmatpush1.msra.mxu0 0.0
  %147 = vmatprep.subr.mxu0 0.0
  %148 = vmatpush1.msra.mxu0 0.0
  %149 = vmatprep.subr.mxu0 0.0
  %150 = vmatpush1.msra.mxu0 0.0
  %151 = vmatprep.subr.mxu0 0.0
  %152 = vmatpush1.msra.mxu0 0.0
  %153 = vmatprep.subr.mxu0 0.0
  %154 = vmatpush1.msra.mxu0 0.0
  %155 = vmatprep.subr.mxu0 0.0
  %156 = vmatpush1.msra.mxu0 0.0
  %157 = vmatprep.subr.mxu0 0.0
  %158 = vmatpush1.msra.mxu0 0.0
  %159 = vmatprep.subr.mxu0 0.0
  %160 = vmatpush1.msra.mxu0 0.0
  %161 = vmatprep.subr.mxu0 0.0
  %162 = vmatpush1.msra.mxu0 0.0
  %163 = vmatprep.subr.mxu0 0.0
  %164 = vmatpush1.msra.mxu0 0.0
  %165 = vmatprep.subr.mxu0 0.0
  %166 = vmatpush1.msra.mxu0 0.0
  %167 = vmatprep.subr.mxu0 0.0
  %168 = vmatpush1.msra.mxu0 0.0
  %169 = vmatprep.subr.mxu0 %v47
  %170 = vmatpush1.msra.mxu0 %v46
  %171 = vmatprep.subr.mxu0 %v43
  %172 = vmatpush1.msra.mxu0 %v42
  %173 = vmatprep.subr.mxu0 %v39
  %174 = vmatpush1.msra.mxu0 %v38
  %175 = vmatprep.subr.mxu0 %v35
  %176 = vmatpush1.msra.mxu0 %v34
  %177 = vmatprep.subr.mxu0 0.0
  %178 = vmatpush2.msra.mxu0 0.0
  %179 = vmatprep.subr.mxu0 0.0
  %180 = vmatpush2.msra.mxu0 0.0
  %181 = vmatprep.subr.mxu0 0.0
  %182 = vmatpush2.msra.mxu0 0.0
  %183 = vmatprep.subr.mxu0 0.0
  %184 = vmatpush2.msra.mxu0 0.0
  %185 = vmatprep.subr.mxu0 0.0
  %186 = vmatpush2.msra.mxu0 0.0
  %187 = vmatprep.subr.mxu0 0.0
  %188 = vmatpush2.msra.mxu0 0.0
  %189 = vmatprep.subr.mxu0 0.0
  %190 = vmatpush2.msra.mxu0 0.0
  %191 = vmatprep.subr.mxu0 0.0
  %192 = vmatpush2.msra.mxu0 0.0
  %193 = vmatprep.subr.mxu0 0.0
  %194 = vmatpush2.msra.mxu0 0.0
  %195 = vmatprep.subr.mxu0 0.0
  %196 = vmatpush2.msra.mxu0 0.0
  %197 = vmatprep.subr.mxu0 0.0
  %198 = vmatpush2.msra.mxu0 0.0
  %199 = vmatprep.subr.mxu0 0.0
  %200 = vmatpush2.msra.mxu0 0.0
  %201 = vmatprep.subr.mxu0 0.0
  %202 = vmatpush2.msra.mxu0 0.0
  %203 = vmatprep.subr.mxu0 0.0
  %204 = vmatpush2.msra.mxu0 0.0
  %205 = vmatprep.subr.mxu0 0.0
  %206 = vmatpush2.msra.mxu0 0.0
  %207 = vmatprep.subr.mxu0 0.0
  %208 = vmatpush2.msra.mxu0 0.0
  %209 = vmatprep.mubr.f32.mxu0 0.0
  %210 = vmatmul.mubr.f32.gmra.mxu0 %v72
  %v211 = vpop.f32.mrf.mxu0
  %v212 = vadd.f32 %v61, %v211
  %v213 = vpop.f32.mrf.mxu0
  %v214 = vadd.f32 %v65, %v213
  %215 = vdwg.mxu0
  %v216 = vmax.f32 %v141, 0.0
  %v217 = vmax.f32 %v143, 0.0
  %v218 = vmax.f32 %v212, 0.0
  %v219 = vmax.f32 %v214, 0.0
  %v220 = vld [vmem:[%s1] sm:$0xff]
  %v221 = vld [vmem:[%s1 + $0x8] sm:$0xff]
  %v222 = vld [vmem:[%s1 + $0x10] sm:$0xff]
  %v223 = vld [vmem:[%s1 + $0x18] sm:$0xff]
  %v224 = vadd.f32 %v216, %v220
  %v225 = vadd.f32 %v217, %v221
  %v226 = vadd.f32 %v218, %v222
  %v227 = vadd.f32 %v219, %v223
  %v228 = vld [vmem:[%s4] sm:$0xff]
  %v229 = vld [vmem:[%s4 + $0x8] sm:$0xff]
  %v230 = vld [vmem:[%s4 + $0x10] sm:$0xff]
  %v231 = vld [vmem:[%s4 + $0x18] sm:$0xff]
  %v232 = vld [vmem:[%s4 + $0x20] sm:$0xff]
  %v233 = vld [vmem:[%s4 + $0x28] sm:$0xff]
  %v234 = vld [vmem:[%s4 + $0x30] sm:$0xff]
  %v235 = vld [vmem:[%s4 + $0x38] sm:$0xff]
  %v236 = vld [vmem:[%s4 + $0x40] sm:$0xff]
  %v237 = vld [vmem:[%s4 + $0x48] sm:$0xff]
  %v238 = vld [vmem:[%s4 + $0x50] sm:$0xff]
  %v239 = vld [vmem:[%s4 + $0x58] sm:$0xff]
  %v240 = vld [vmem:[%s4 + $0x60] sm:$0xff]
  %v241 = vld [vmem:[%s4 + $0x68] sm:$0xff]
  %v242 = vld [vmem:[%s4 + $0x70] sm:$0xff]
  %v243 = vld [vmem:[%s4 + $0x78] sm:$0xff]
  %v244 = vld [vmem:[%s4 + $0x80] sm:$0xff]
  %v245 = vld [vmem:[%s4 + $0x88] sm:$0xff]
  %v246 = vld [vmem:[%s4 + $0x90] sm:$0xff]
  %v247 = vld [vmem:[%s4 + $0x98] sm:$0xff]
  %v248 = vld [vmem:[%s4 + $0xa0] sm:$0xff]
  %v249 = vld [vmem:[%s4 + $0xa8] sm:$0xff]
  %v250 = vld [vmem:[%s4 + $0xb0] sm:$0xff]
  %v251 = vld [vmem:[%s4 + $0xb8] sm:$0xff]
  %v252 = vld [vmem:[%s4 + $0xc0] sm:$0xff]
  %v253 = vld [vmem:[%s4 + $0xc8] sm:$0xff]
  %v254 = vld [vmem:[%s4 + $0xd0] sm:$0xff]
  %v255 = vld [vmem:[%s4 + $0xd8] sm:$0xff]
  %v256 = vld [vmem:[%s4 + $0xe0] sm:$0xff]
  %v257 = vld [vmem:[%s4 + $0xe8] sm:$0xff]
  %v258 = vld [vmem:[%s4 + $0xf0] sm:$0xff]
  %v259 = vld [vmem:[%s4 + $0xf8] sm:$0xff]
  %v260 = vld [vmem:[%s4 + $0x100] sm:$0xff]
  %v261 = vld [vmem:[%s4 + $0x108] sm:$0xff]
  %v262 = vld [vmem:[%s4 + $0x110] sm:$0xff]
  %v263 = vld [vmem:[%s4 + $0x118] sm:$0xff]
  %v264 = vld [vmem:[%s4 + $0x120] sm:$0xff]
  %v265 = vld [vmem:[%s4 + $0x128] sm:$0xff]
  %v266 = vld [vmem:[%s4 + $0x130] sm:$0xff]
  %v267 = vld [vmem:[%s4 + $0x138] sm:$0xff]
  %v268 = vld [vmem:[%s4 + $0x140] sm:$0xff]
  %v269 = vld [vmem:[%s4 + $0x148] sm:$0xff]
  %v270 = vld [vmem:[%s4 + $0x150] sm:$0xff]
  %v271 = vld [vmem:[%s4 + $0x158] sm:$0xff]
  %v272 = vld [vmem:[%s4 + $0x160] sm:$0xff]
  %v273 = vld [vmem:[%s4 + $0x168] sm:$0xff]
  %v274 = vld [vmem:[%s4 + $0x170] sm:$0xff]
  %v275 = vld [vmem:[%s4 + $0x178] sm:$0xff]
  %v276 = vld [vmem:[%s4 + $0x180] sm:$0xff]
  %v277 = vld [vmem:[%s4 + $0x188] sm:$0xff]
  %v278 = vld [vmem:[%s4 + $0x190] sm:$0xff]
  %v279 = vld [vmem:[%s4 + $0x198] sm:$0xff]
  %v280 = vld [vmem:[%s4 + $0x1a0] sm:$0xff]
  %v281 = vld [vmem:[%s4 + $0x1a8] sm:$0xff]
  %v282 = vld [vmem:[%s4 + $0x1b0] sm:$0xff]
  %v283 = vld [vmem:[%s4 + $0x1b8] sm:$0xff]
  %v284 = vld [vmem:[%s4 + $0x1c0] sm:$0xff]
  %v285 = vld [vmem:[%s4 + $0x1c8] sm:$0xff]
  %v286 = vld [vmem:[%s4 + $0x1d0] sm:$0xff]
  %v287 = vld [vmem:[%s4 + $0x1d8] sm:$0xff]
  %v288 = vld [vmem:[%s4 + $0x1e0] sm:$0xff]
  %v289 = vld [vmem:[%s4 + $0x1e8] sm:$0xff]
  %v290 = vld [vmem:[%s4 + $0x1f0] sm:$0xff]
  %v291 = vld [vmem:[%s4 + $0x1f8] sm:$0xff]
  %v292 = vld [vmem:[%s4 + $0x200] sm:$0xff]
  %v293 = vld [vmem:[%s4 + $0x208] sm:$0xff]
  %v294 = vld [vmem:[%s4 + $0x210] sm:$0xff]
  %v295 = vld [vmem:[%s4 + $0x218] sm:$0xff]
  %v296 = vld [vmem:[%s4 + $0x220] sm:$0xff]
  %v297 = vld [vmem:[%s4 + $0x228] sm:$0xff]
  %v298 = vld [vmem:[%s4 + $0x230] sm:$0xff]
  %v299 = vld [vmem:[%s4 + $0x238] sm:$0xff]
  %v300 = vld [vmem:[%s4 + $0x240] sm:$0xff]
  %v301 = vld [vmem:[%s4 + $0x248] sm:$0xff]
  %v302 = vld [vmem:[%s4 + $0x250] sm:$0xff]
  %v303 = vld [vmem:[%s4 + $0x258] sm:$0xff]
  %v304 = vld [vmem:[%s4 + $0x260] sm:$0xff]
  %v305 = vld [vmem:[%s4 + $0x268] sm:$0xff]
  %v306 = vld [vmem:[%s4 + $0x270] sm:$0xff]
  %v307 = vld [vmem:[%s4 + $0x278] sm:$0xff]
  %v308 = vld [vmem:[%s4 + $0x280] sm:$0xff]
  %v309 = vld [vmem:[%s4 + $0x288] sm:$0xff]
  %v310 = vld [vmem:[%s4 + $0x290] sm:$0xff]
  %v311 = vld [vmem:[%s4 + $0x298] sm:$0xff]
  %v312 = vld [vmem:[%s4 + $0x2a0] sm:$0xff]
  %v313 = vld [vmem:[%s4 + $0x2a8] sm:$0xff]
  %v314 = vld [vmem:[%s4 + $0x2b0] sm:$0xff]
  %v315 = vld [vmem:[%s4 + $0x2b8] sm:$0xff]
  %v316 = vld [vmem:[%s4 + $0x2c0] sm:$0xff]
  %v317 = vld [vmem:[%s4 + $0x2c8] sm:$0xff]
  %v318 = vld [vmem:[%s4 + $0x2d0] sm:$0xff]
  %v319 = vld [vmem:[%s4 + $0x2d8] sm:$0xff]
  %v320 = vld [vmem:[%s4 + $0x2e0] sm:$0xff]
  %v321 = vld [vmem:[%s4 + $0x2e8] sm:$0xff]
  %v322 = vld [vmem:[%s4 + $0x2f0] sm:$0xff]
  %v323 = vld [vmem:[%s4 + $0x2f8] sm:$0xff]
  %v324 = vld [vmem:[%s4 + $0x300] sm:$0xff]
  %v325 = vld [vmem:[%s4 + $0x308] sm:$0xff]
  %v326 = vld [vmem:[%s4 + $0x310] sm:$0xff]
  %v327 = vld [vmem:[%s4 + $0x318] sm:$0xff]
  %v328 = vld [vmem:[%s4 + $0x320] sm:$0xff]
  %v329 = vld [vmem:[%s4 + $0x328] sm:$0xff]
  %v330 = vld [vmem:[%s4 + $0x330] sm:$0xff]
  %v331 = vld [vmem:[%s4 + $0x338] sm:$0xff]
  %v332 = vld [vmem:[%s4 + $0x340] sm:$0xff]
  %v333 = vld [vmem:[%s4 + $0x348] sm:$0xff]
  %v334 = vld [vmem:[%s4 + $0x350] sm:$0xff]
  %v335 = vld [vmem:[%s4 + $0x358] sm:$0xff]
  %v336 = vld [vmem:[%s4 + $0x360] sm:$0xff]
  %v337 = vld [vmem:[%s4 + $0x368] sm:$0xff]
  %v338 = vld [vmem:[%s4 + $0x370] sm:$0xff]
  %v339 = vld [vmem:[%s4 + $0x378] sm:$0xff]
  %v340 = vld [vmem:[%s4 + $0x380] sm:$0xff]
  %v341 = vld [vmem:[%s4 + $0x388] sm:$0xff]
  %v342 = vld [vmem:[%s4 + $0x390] sm:$0xff]
  %v343 = vld [vmem:[%s4 + $0x398] sm:$0xff]
  %v344 = vld [vmem:[%s4 + $0x3a0] sm:$0xff]
  %v345 = vld [vmem:[%s4 + $0x3a8] sm:$0xff]
  %v346 = vld [vmem:[%s4 + $0x3b0] sm:$0xff]
  %v347 = vld [vmem:[%s4 + $0x3b8] sm:$0xff]
  %v348 = vld [vmem:[%s4 + $0x3c0] sm:$0xff]
  %v349 = vld [vmem:[%s4 + $0x3c8] sm:$0xff]
  %v350 = vld [vmem:[%s4 + $0x3d0] sm:$0xff]
  %v351 = vld [vmem:[%s4 + $0x3d8] sm:$0xff]
  %v352 = vld [vmem:[%s4 + $0x3e0] sm:$0xff]
  %v353 = vld [vmem:[%s4 + $0x3e8] sm:$0xff]
  %v354 = vld [vmem:[%s4 + $0x3f0] sm:$0xff]
  %v355 = vld [vmem:[%s4 + $0x3f8] sm:$0xff]
  %v356 = vld [vmem:[%s4 + $0x400] sm:$0xff]
  %v357 = vld [vmem:[%s4 + $0x408] sm:$0xff]
  %v358 = vld [vmem:[%s4 + $0x410] sm:$0xff]
  %v359 = vld [vmem:[%s4 + $0x418] sm:$0xff]
  %v360 = vld [vmem:[%s4 + $0x420] sm:$0xff]
  %v361 = vld [vmem:[%s4 + $0x428] sm:$0xff]
  %v362 = vld [vmem:[%s4 + $0x430] sm:$0xff]
  %v363 = vld [vmem:[%s4 + $0x438] sm:$0xff]
  %v364 = vld [vmem:[%s4 + $0x440] sm:$0xff]
  %v365 = vld [vmem:[%s4 + $0x448] sm:$0xff]
  %v366 = vld [vmem:[%s4 + $0x450] sm:$0xff]
  %v367 = vld [vmem:[%s4 + $0x458] sm:$0xff]
  %v368 = vld [vmem:[%s4 + $0x460] sm:$0xff]
  %v369 = vld [vmem:[%s4 + $0x468] sm:$0xff]
  %v370 = vld [vmem:[%s4 + $0x470] sm:$0xff]
  %v371 = vld [vmem:[%s4 + $0x478] sm:$0xff]
  %v372 = vld [vmem:[%s4 + $0x480] sm:$0xff]
  %v373 = vld [vmem:[%s4 + $0x488] sm:$0xff]
  %v374 = vld [vmem:[%s4 + $0x490] sm:$0xff]
  %v375 = vld [vmem:[%s4 + $0x498] sm:$0xff]
  %v376 = vld [vmem:[%s4 + $0x4a0] sm:$0xff]
  %v377 = vld [vmem:[%s4 + $0x4a8] sm:$0xff]
  %v378 = vld [vmem:[%s4 + $0x4b0] sm:$0xff]
  %v379 = vld [vmem:[%s4 + $0x4b8] sm:$0xff]
  %v380 = vld [vmem:[%s4 + $0x4c0] sm:$0xff]
  %v381 = vld [vmem:[%s4 + $0x4c8] sm:$0xff]
  %v382 = vld [vmem:[%s4 + $0x4d0] sm:$0xff]
  %v383 = vld [vmem:[%s4 + $0x4d8] sm:$0xff]
  %v384 = vld [vmem:[%s4 + $0x4e0] sm:$0xff]
  %v385 = vld [vmem:[%s4 + $0x4e8] sm:$0xff]
  %v386 = vld [vmem:[%s4 + $0x4f0] sm:$0xff]
  %v387 = vld [vmem:[%s4 + $0x4f8] sm:$0xff]
  %v388 = vld [vmem:[%s4 + $0x500] sm:$0xff]
  %v389 = vld [vmem:[%s4 + $0x508] sm:$0xff]
  %v390 = vld [vmem:[%s4 + $0x510] sm:$0xff]
  %v391 = vld [vmem:[%s4 + $0x518] sm:$0xff]
  %v392 = vld [vmem:[%s4 + $0x520] sm:$0xff]
  %v393 = vld [vmem:[%s4 + $0x528] sm:$0xff]
  %v394 = vld [vmem:[%s4 + $0x530] sm:$0xff]
  %v395 = vld [vmem:[%s4 + $0x538] sm:$0xff]
  %v396 = vld [vmem:[%s4 + $0x540] sm:$0xff]
  %v397 = vld [vmem:[%s4 + $0x548] sm:$0xff]
  %v398 = vld [vmem:[%s4 + $0x550] sm:$0xff]
  %v399 = vld [vmem:[%s4 + $0x558] sm:$0xff]
  %v400 = vld [vmem:[%s4 + $0x560] sm:$0xff]
  %v401 = vld [vmem:[%s4 + $0x568] sm:$0xff]
  %v402 = vld [vmem:[%s4 + $0x570] sm:$0xff]
  %v403 = vld [vmem:[%s4 + $0x578] sm:$0xff]
  %v404 = vld [vmem:[%s4 + $0x580] sm:$0xff]
  %v405 = vld [vmem:[%s4 + $0x588] sm:$0xff]
  %v406 = vld [vmem:[%s4 + $0x590] sm:$0xff]
  %v407 = vld [vmem:[%s4 + $0x598] sm:$0xff]
  %v408 = vld [vmem:[%s4 + $0x5a0] sm:$0xff]
  %v409 = vld [vmem:[%s4 + $0x5a8] sm:$0xff]
  %v410 = vld [vmem:[%s4 + $0x5b0] sm:$0xff]
  %v411 = vld [vmem:[%s4 + $0x5b8] sm:$0xff]
  %v412 = vld [vmem:[%s4 + $0x5c0] sm:$0xff]
  %v413 = vld [vmem:[%s4 + $0x5c8] sm:$0xff]
  %v414 = vld [vmem:[%s4 + $0x5d0] sm:$0xff]
  %v415 = vld [vmem:[%s4 + $0x5d8] sm:$0xff]
  %v416 = vld [vmem:[%s4 + $0x5e0] sm:$0xff]
  %v417 = vld [vmem:[%s4 + $0x5e8] sm:$0xff]
  %v418 = vld [vmem:[%s4 + $0x5f0] sm:$0xff]
  %v419 = vld [vmem:[%s4 + $0x5f8] sm:$0xff]
  %v420 = vld [vmem:[%s5] sm:$0x7]
  %v422 = vlaneseq
  %v423 = vshrl.u32 %v422, 7
  %v424 = vsub.s32 0, %v423
  %v425 = vrot.slane %v420, %v424
  %v426 = vlaneseq
  %v427 = vshrl.u32 %v426, 7
  %v428 = vsub.s32 1, %v427
  %v429 = vrot.slane %v420, %v428
  %v430 = vlaneseq
  %v431 = vshrl.u32 %v430, 7
  %v432 = vsub.s32 2, %v431
  %v433 = vrot.slane %v420, %v432
  %437 = vmatprep.subr.mxu0 %v274
  %438 = vmatpush1.msra.mxu0 %v273
  %439 = vmatprep.subr.mxu0 %v271
  %440 = vmatpush1.msra.mxu0 %v270
  %441 = vmatprep.subr.mxu0 %v268
  %442 = vmatpush1.msra.mxu0 %v267
  %443 = vmatprep.subr.mxu0 %v265
  %444 = vmatpush1.msra.mxu0 %v264
  %445 = vmatprep.subr.mxu0 %v262
  %446 = vmatpush1.msra.mxu0 %v261
  %447 = vmatprep.subr.mxu0 %v259
  %448 = vmatpush1.msra.mxu0 %v258
  %449 = vmatprep.subr.mxu0 %v256
  %450 = vmatpush1.msra.mxu0 %v255
  %451 = vmatprep.subr.mxu0 %v253
  %452 = vmatpush1.msra.mxu0 %v252
  %453 = vmatprep.subr.mxu0 %v250
  %454 = vmatpush1.msra.mxu0 %v249
  %455 = vmatprep.subr.mxu0 %v247
  %456 = vmatpush1.msra.mxu0 %v246
  %457 = vmatprep.subr.mxu0 %v244
  %458 = vmatpush1.msra.mxu0 %v243
  %459 = vmatprep.subr.mxu0 %v241
  %460 = vmatpush1.msra.mxu0 %v240
  %461 = vmatprep.subr.mxu0 %v238
  %462 = vmatpush1.msra.mxu0 %v237
  %463 = vmatprep.subr.mxu0 %v235
  %464 = vmatpush1.msra.mxu0 %v234
  %465 = vmatprep.subr.mxu0 %v232
  %466 = vmatpush1.msra.mxu0 %v231
  %467 = vmatprep.subr.mxu0 %v229
  %468 = vmatpush1.msra.mxu0 %v228
  %469 = vmatprep.subr.mxu0 %v322
  %470 = vmatpush2.msra.mxu0 %v321
  %471 = vmatprep.subr.mxu0 %v319
  %472 = vmatpush2.msra.mxu0 %v318
  %473 = vmatprep.subr.mxu0 %v316
  %474 = vmatpush2.msra.mxu0 %v315
  %475 = vmatprep.subr.mxu0 %v313
  %476 = vmatpush2.msra.mxu0 %v312
  %477 = vmatprep.subr.mxu0 %v310
  %478 = vmatpush2.msra.mxu0 %v309
  %479 = vmatprep.subr.mxu0 %v307
  %480 = vmatpush2.msra.mxu0 %v306
  %481 = vmatprep.subr.mxu0 %v304
  %482 = vmatpush2.msra.mxu0 %v303
  %483 = vmatprep.subr.mxu0 %v301
  %484 = vmatpush2.msra.mxu0 %v300
  %485 = vmatprep.subr.mxu0 %v298
  %486 = vmatpush2.msra.mxu0 %v297
  %487 = vmatprep.subr.mxu0 %v295
  %488 = vmatpush2.msra.mxu0 %v294
  %489 = vmatprep.subr.mxu0 %v292
  %490 = vmatpush2.msra.mxu0 %v291
  %491 = vmatprep.subr.mxu0 %v289
  %492 = vmatpush2.msra.mxu0 %v288
  %493 = vmatprep.subr.mxu0 %v286
  %494 = vmatpush2.msra.mxu0 %v285
  %495 = vmatprep.subr.mxu0 %v283
  %496 = vmatpush2.msra.mxu0 %v282
  %497 = vmatprep.subr.mxu0 %v280
  %498 = vmatpush2.msra.mxu0 %v279
  %499 = vmatprep.subr.mxu0 %v277
  %500 = vmatpush2.msra.mxu0 %v276
  %501 = vmatprep.mubr.f32.mxu0 %v225
  %502 = vmatmul.mubr.f32.gmra.mxu0 %v224
  %v503 = vpop.f32.mrf.mxu0
  %v504 = vadd.f32 %v425, %v503
  %v505 = vpop.f32.mrf.mxu0
  %v506 = vadd.f32 %v429, %v505
  %507 = vdwg.mxu0
  %508 = vmatprep.subr.mxu0 %v370
  %509 = vmatpush1.msra.mxu0 %v369
  %510 = vmatprep.subr.mxu0 %v367
  %511 = vmatpush1.msra.mxu0 %v366
  %512 = vmatprep.subr.mxu0 %v364
  %513 = vmatpush1.msra.mxu0 %v363
  %514 = vmatprep.subr.mxu0 %v361
  %515 = vmatpush1.msra.mxu0 %v360
  %516 = vmatprep.subr.mxu0 %v358
  %517 = vmatpush1.msra.mxu0 %v357
  %518 = vmatprep.subr.mxu0 %v355
  %519 = vmatpush1.msra.mxu0 %v354
  %520 = vmatprep.subr.mxu0 %v352
  %521 = vmatpush1.msra.mxu0 %v351
  %522 = vmatprep.subr.mxu0 %v349
  %523 = vmatpush1.msra.mxu0 %v348
  %524 = vmatprep.subr.mxu0 %v346
  %525 = vmatpush1.msra.mxu0 %v345
  %526 = vmatprep.subr.mxu0 %v343
  %527 = vmatpush1.msra.mxu0 %v342
  %528 = vmatprep.subr.mxu0 %v340
  %529 = vmatpush1.msra.mxu0 %v339
  %530 = vmatprep.subr.mxu0 %v337
  %531 = vmatpush1.msra.mxu0 %v336
  %532 = vmatprep.subr.mxu0 %v334
  %533 = vmatpush1.msra.mxu0 %v333
  %534 = vmatprep.subr.mxu0 %v331
  %535 = vmatpush1.msra.mxu0 %v330
  %536 = vmatprep.subr.mxu0 %v328
  %537 = vmatpush1.msra.mxu0 %v327
  %538 = vmatprep.subr.mxu0 %v325
  %539 = vmatpush1.msra.mxu0 %v324
  %540 = vmatprep.subr.mxu0 %v418
  %541 = vmatpush2.msra.mxu0 %v417
  %542 = vmatprep.subr.mxu0 %v415
  %543 = vmatpush2.msra.mxu0 %v414
  %544 = vmatprep.subr.mxu0 %v412
  %545 = vmatpush2.msra.mxu0 %v411
  %546 = vmatprep.subr.mxu0 %v409
  %547 = vmatpush2.msra.mxu0 %v408
  %548 = vmatprep.subr.mxu0 %v406
  %549 = vmatpush2.msra.mxu0 %v405
  %550 = vmatprep.subr.mxu0 %v403
  %551 = vmatpush2.msra.mxu0 %v402
  %552 = vmatprep.subr.mxu0 %v400
  %553 = vmatpush2.msra.mxu0 %v399
  %554 = vmatprep.subr.mxu0 %v397
  %555 = vmatpush2.msra.mxu0 %v396
  %556 = vmatprep.subr.mxu0 %v394
  %557 = vmatpush2.msra.mxu0 %v393
  %558 = vmatprep.subr.mxu0 %v391
  %559 = vmatpush2.msra.mxu0 %v390
  %560 = vmatprep.subr.mxu0 %v388
  %561 = vmatpush2.msra.mxu0 %v387
  %562 = vmatprep.subr.mxu0 %v385
  %563 = vmatpush2.msra.mxu0 %v384
  %564 = vmatprep.subr.mxu0 %v382
  %565 = vmatpush2.msra.mxu0 %v381
  %566 = vmatprep.subr.mxu0 %v379
  %567 = vmatpush2.msra.mxu0 %v378
  %568 = vmatprep.subr.mxu0 %v376
  %569 = vmatpush2.msra.mxu0 %v375
  %570 = vmatprep.subr.mxu0 %v373
  %571 = vmatpush2.msra.mxu0 %v372
  %572 = vmatprep.mubr.f32.mxu0 %v227
  %573 = vmatmul.mubr.f32.gmra.mxu0 %v226
  %v574 = vpop.f32.mrf.mxu0
  %v575 = vadd.f32 %v504, %v574
  %v576 = vpop.f32.mrf.mxu0
  %v577 = vadd.f32 %v506, %v576
  %578 = vdwg.mxu0
  %579 = vmatprep.subr.mxu0 0.0
  %580 = vmatpush1.msra.mxu0 %v275
  %581 = vmatprep.subr.mxu0 0.0
  %582 = vmatpush1.msra.mxu0 %v272
  %583 = vmatprep.subr.mxu0 0.0
  %584 = vmatpush1.msra.mxu0 %v269
  %585 = vmatprep.subr.mxu0 0.0
  %586 = vmatpush1.msra.mxu0 %v266
  %587 = vmatprep.subr.mxu0 0.0
  %588 = vmatpush1.msra.mxu0 %v263
  %589 = vmatprep.subr.mxu0 0.0
  %590 = vmatpush1.msra.mxu0 %v260
  %591 = vmatprep.subr.mxu0 0.0
  %592 = vmatpush1.msra.mxu0 %v257
  %593 = vmatprep.subr.mxu0 0.0
  %594 = vmatpush1.msra.mxu0 %v254
  %595 = vmatprep.subr.mxu0 0.0
  %596 = vmatpush1.msra.mxu0 %v251
  %597 = vmatprep.subr.mxu0 0.0
  %598 = vmatpush1.msra.mxu0 %v248
  %599 = vmatprep.subr.mxu0 0.0
  %600 = vmatpush1.msra.mxu0 %v245
  %601 = vmatprep.subr.mxu0 0.0
  %602 = vmatpush1.msra.mxu0 %v242
  %603 = vmatprep.subr.mxu0 0.0
  %604 = vmatpush1.msra.mxu0 %v239
  %605 = vmatprep.subr.mxu0 0.0
  %606 = vmatpush1.msra.mxu0 %v236
  %607 = vmatprep.subr.mxu0 0.0
  %608 = vmatpush1.msra.mxu0 %v233
  %609 = vmatprep.subr.mxu0 0.0
  %610 = vmatpush1.msra.mxu0 %v230
  %611 = vmatprep.subr.mxu0 0.0
  %612 = vmatpush2.msra.mxu0 %v323
  %613 = vmatprep.subr.mxu0 0.0
  %614 = vmatpush2.msra.mxu0 %v320
  %615 = vmatprep.subr.mxu0 0.0
  %616 = vmatpush2.msra.mxu0 %v317
  %617 = vmatprep.subr.mxu0 0.0
  %618 = vmatpush2.msra.mxu0 %v314
  %619 = vmatprep.subr.mxu0 0.0
  %620 = vmatpush2.msra.mxu0 %v311
  %621 = vmatprep.subr.mxu0 0.0
  %622 = vmatpush2.msra.mxu0 %v308
  %623 = vmatprep.subr.mxu0 0.0
  %624 = vmatpush2.msra.mxu0 %v305
  %625 = vmatprep.subr.mxu0 0.0
  %626 = vmatpush2.msra.mxu0 %v302
  %627 = vmatprep.subr.mxu0 0.0
  %628 = vmatpush2.msra.mxu0 %v299
  %629 = vmatprep.subr.mxu0 0.0
  %630 = vmatpush2.msra.mxu0 %v296
  %631 = vmatprep.subr.mxu0 0.0
  %632 = vmatpush2.msra.mxu0 %v293
  %633 = vmatprep.subr.mxu0 0.0
  %634 = vmatpush2.msra.mxu0 %v290
  %635 = vmatprep.subr.mxu0 0.0
  %636 = vmatpush2.msra.mxu0 %v287
  %637 = vmatprep.subr.mxu0 0.0
  %638 = vmatpush2.msra.mxu0 %v284
  %639 = vmatprep.subr.mxu0 0.0
  %640 = vmatpush2.msra.mxu0 %v281
  %641 = vmatprep.subr.mxu0 0.0
  %642 = vmatpush2.msra.mxu0 %v278
  %643 = vmatprep.mubr.f32.mxu0 %v225
  %644 = vmatmul.mubr.f32.gmra.mxu0 %v224
  %v645 = vpop.f32.mrf.mxu0
  %v646 = vadd.f32 %v433, %v645
  %v647 = vpop.f32.mrf.mxu0
  %648 = vdwg.mxu0
  %649 = vmatprep.subr.mxu0 0.0
  %650 = vmatpush1.msra.mxu0 %v371
  %651 = vmatprep.subr.mxu0 0.0
  %652 = vmatpush1.msra.mxu0 %v368
  %653 = vmatprep.subr.mxu0 0.0
  %654 = vmatpush1.msra.mxu0 %v365
  %655 = vmatprep.subr.mxu0 0.0
  %656 = vmatpush1.msra.mxu0 %v362
  %657 = vmatprep.subr.mxu0 0.0
  %658 = vmatpush1.msra.mxu0 %v359
  %659 = vmatprep.subr.mxu0 0.0
  %660 = vmatpush1.msra.mxu0 %v356
  %661 = vmatprep.subr.mxu0 0.0
  %662 = vmatpush1.msra.mxu0 %v353
  %663 = vmatprep.subr.mxu0 0.0
  %664 = vmatpush1.msra.mxu0 %v350
  %665 = vmatprep.subr.mxu0 0.0
  %666 = vmatpush1.msra.mxu0 %v347
  %667 = vmatprep.subr.mxu0 0.0
  %668 = vmatpush1.msra.mxu0 %v344
  %669 = vmatprep.subr.mxu0 0.0
  %670 = vmatpush1.msra.mxu0 %v341
  %671 = vmatprep.subr.mxu0 0.0
  %672 = vmatpush1.msra.mxu0 %v338
  %673 = vmatprep.subr.mxu0 0.0
  %674 = vmatpush1.msra.mxu0 %v335
  %675 = vmatprep.subr.mxu0 0.0
  %676 = vmatpush1.msra.mxu0 %v332
  %677 = vmatprep.subr.mxu0 0.0
  %678 = vmatpush1.msra.mxu0 %v329
  %679 = vmatprep.subr.mxu0 0.0
  %680 = vmatpush1.msra.mxu0 %v326
  %681 = vmatprep.subr.mxu0 0.0
  %682 = vmatpush2.msra.mxu0 %v419
  %683 = vmatprep.subr.mxu0 0.0
  %684 = vmatpush2.msra.mxu0 %v416
  %685 = vmatprep.subr.mxu0 0.0
  %686 = vmatpush2.msra.mxu0 %v413
  %687 = vmatprep.subr.mxu0 0.0
  %688 = vmatpush2.msra.mxu0 %v410
  %689 = vmatprep.subr.mxu0 0.0
  %690 = vmatpush2.msra.mxu0 %v407
  %691 = vmatprep.subr.mxu0 0.0
  %692 = vmatpush2.msra.mxu0 %v404
  %693 = vmatprep.subr.mxu0 0.0
  %694 = vmatpush2.msra.mxu0 %v401
  %695 = vmatprep.subr.mxu0 0.0
  %696 = vmatpush2.msra.mxu0 %v398
  %697 = vmatprep.subr.mxu0 0.0
  %698 = vmatpush2.msra.mxu0 %v395
  %699 = vmatprep.subr.mxu0 0.0
  %700 = vmatpush2.msra.mxu0 %v392
  %701 = vmatprep.subr.mxu0 0.0
  %702 = vmatpush2.msra.mxu0 %v389
  %703 = vmatprep.subr.mxu0 0.0
  %704 = vmatpush2.msra.mxu0 %v386
  %705 = vmatprep.subr.mxu0 0.0
  %706 = vmatpush2.msra.mxu0 %v383
  %707 = vmatprep.subr.mxu0 0.0
  %708 = vmatpush2.msra.mxu0 %v380
  %709 = vmatprep.subr.mxu0 0.0
  %710 = vmatpush2.msra.mxu0 %v377
  %711 = vmatprep.subr.mxu0 0.0
  %712 = vmatpush2.msra.mxu0 %v374
  %713 = vmatprep.mubr.f32.mxu0 %v227
  %714 = vmatmul.mubr.f32.gmra.mxu0 %v226
  %v715 = vpop.f32.mrf.mxu0
  %v716 = vadd.f32 %v646, %v715
  %v717 = vpop.f32.mrf.mxu0
  %718 = vdwg.mxu0
  %v719 = vmax.f32 %v575, 0.0
  %v720 = vmax.f32 %v577, 0.0
  %v721 = vmax.f32 %v716, 0.0
  %v722 = vld [vmem:[%s6] sm:$0x7]
  %v724 = vlaneseq
  %v725 = vshrl.u32 %v724, 7
  %v726 = vsub.s32 0, %v725
  %v727 = vrot.slane %v722, %v726
  %v728 = vlaneseq
  %v729 = vshrl.u32 %v728, 7
  %v730 = vsub.s32 1, %v729
  %v731 = vrot.slane %v722, %v730
  %v732 = vlaneseq
  %v733 = vshrl.u32 %v732, 7
  %v734 = vsub.s32 2, %v733
  %v735 = vrot.slane %v722, %v734
  %v739 = vmul.f32 %v719, %v727
  %v740 = vmul.f32 %v720, %v731
  %v741 = vmul.f32 %v721, %v735
  %v742 = vadd.f32 %v739, %v740
  %vm743 = vcmask 359424
  %v744 = vsel %vm743, %v741, 0.0
  %v745 = vadd.f32 %v742, %v744
  %746 = vadd.xlane.f32.xlu0 %v745
  %v747 = vpop.xlane.xlu0 %746
  %v748 = vld [vmem:[#allocation2] sm:$0x1]
  %v750 = vlaneseq
  %v751 = vshrl.u32 %v750, 7
  %v752 = vsub.s32 0, %v751
  %v753 = vrot.slane %v748, %v752
  %v755 = vadd.f32 %v747, %v753
  %vm756 = vcmask 7168
  %757 = vst.msk [vmem:[%s8] sm:$0xff] %vm756, %v755
  // Predicated region
  $region34: #{tpu_custom_call.1} parent=0 // pred_check
    _
  $region35: #{tpu_custom_call.1} parent=0 // pred_check_branch
    %759 = sbr.rel (0) target = $region37
  $region36: #{tpu_custom_call.1} parent=0 // pred_region
    _
  $region37: #{tpu_custom_call.1} parent=0 // pred_fallthru
    _
  // Predicated region
  $region38: #{tpu_custom_call.1} parent=0 // pred_check
    _
  $region39: #{tpu_custom_call.1} parent=0 // pred_check_branch
    %761 = sbr.rel (0) target = $region41
  $region40: #{tpu_custom_call.1} parent=0 // pred_region
    _
  $region41: #{tpu_custom_call.1} parent=0 // pred_fallthru
    _

</llo_original>
